<compile_context>
chip_gen: v7x
topology: tpu7x:2x2x1
jax: 0.10.0
libtpu: 0.0.40
codegen_flags: <defaults>
</compile_context>

<pallas_src>
import math

import jax
import jax.numpy as jnp
from jax.experimental import pallas as pl
from jax.experimental.pallas import tpu as pltpu

# ---- small, forward-consistent shapes -------------------------------------
N = 32           # batch (number of sequences) -> TB = 16, 2 parallel grid steps
T = 8            # sequence length (== f32 sublane tile -> free [R,H]->[TB,T,H])
DIN = 32         # input_dim
DE = 24          # expert hidden_size (!= hidden_dim -> adapters are Linear)
H = 16           # hidden_dim
C = 8            # num_classes
E = 3            # number of experts

_NEG_BIG = -1e30  # softmax "minus infinity" for padded gate lanes


def _pick_tb(n: int) -> int:
    """Batch tile: multiple of 8 (sublane rule for the (TB,128) output block)
    or == N; prefer the largest tile that still leaves >= 2 grid steps."""
    cands = [tb for tb in (64, 32, 16, 8) if n % tb == 0]
    for tb in cands:
        if n // tb >= 2:
            return tb
    return cands[0] if cands else n


def ensemble_kernel(x_ref, mask_ref, w1_ref, w2_ref, w3_ref, out_ref):
    # x_ref:   [R, DIN]          tokens of TB sequences (flattened)
    # mask_ref:[TB, T]           validity mask (f32)
    # w1_ref:  [DIN+1, 2*GP]     [gate(rep,scaled) | experts] weights, last row = biases
    # w2_ref:  [2*GP, H]         [wa*DE ; 0 ; ba_rep ; 0] adapter slab
    # w3_ref:  [H+1, CP]         classifier weights, last row = bias (lane-padded)
    # out_ref: [TB, CP]
    din = w1_ref.shape[0] - 1          # contraction rows (last row is the bias)
    gp = w1_ref.shape[1] // 2          # 128-lane half width (gate | experts)
    h = w2_ref.shape[1]                # hidden_dim
    tb, t = mask_ref.shape             # sequences / tokens in this tile

    x = x_ref[...]                                                   # [R, DIN]

    # -- fused gate + expert matmul: a single MXU push over the [DIN, 2*GP] slab.
    z = (jnp.dot(x, w1_ref[:din, :], preferred_element_type=jnp.float32)
         + w1_ref[pl.ds(din, 1), :].astype(jnp.float32))             # [R, 2*GP]
    gl = z[:, :gp]                     # replicated gate logits (each g_i appears DE times)
    hx = z[:, gp:]                     # stacked expert outputs   (dropout == identity)

    # -- softmax over the replicated gate lanes -> g_i / DE (padded lanes vanish
    #    via their -1e30 bias); the missing DE is folded into the adapter slab.
    m = jnp.max(gl, axis=-1, keepdims=True)
    ex = jnp.exp(gl - m)
    gs = ex * pl.reciprocal(jnp.sum(ex, axis=-1, keepdims=True), approx=True)

    # -- fused adapter + adapter-bias matmul: one MXU push, 256 contraction rows.
    cat = jnp.concatenate([hx * gs, gs], axis=-1)                    # [R, 2*GP]
    y = jnp.dot(cat.astype(w2_ref.dtype), w2_ref[...],
                preferred_element_type=jnp.float32)                  # [R, H] f32

    # -- masked mean pool over T: VPU multiply + sublane reduce; exact divide.
    msk = mask_ref[...]                                              # [TB, T]
    pooled = jnp.sum(y.reshape(tb, t, h) * msk[:, :, None], axis=1)  # [TB, H]
    pooled = pooled / jnp.sum(msk, axis=1, keepdims=True)            # counts >= 1

    # -- classifier (+ bias row), lane-dense CP-wide store (unmasked vst).
    out = (jnp.dot(pooled.astype(w3_ref.dtype), w3_ref[:h, :],
                   preferred_element_type=jnp.float32)
           + w3_ref[pl.ds(h, 1), :].astype(jnp.float32))             # [TB, CP]
    out_ref[...] = out.astype(out_ref.dtype)


def ensemble_forward(x, mask, params, *, matmul_dtype=jnp.float32):
    """x: [N, T, DIN] float, mask: [N, T] bool/int. Returns [N, C] float32.

    matmul_dtype: keep f32 on v5e; pass jnp.bfloat16 on v6e/v7x (MXU operands
    only — all softmax/pooling/elementwise math stays f32 inside the kernel).
    """
    wg, bg, we, be, wa, ba, wf, bf = params
    n, t, din = x.shape
    e, _, de = we.shape
    h = wa.shape[-1]
    c = wf.shape[-1]
    ede = e * de
    gp = ((ede + 127) // 128) * 128        # lane-aligned half width (128 here)
    cp = ((c + 127) // 128) * 128          # lane-dense classifier width (128)
    tb = _pick_tb(n)
    r = tb * t
    scale = 1.0 / math.sqrt(float(h))

    # ---- weight packing (glue; pre-pack once in production) ----------------
    # slab 1: [gate (replicated over DE lanes, temperature folded) | experts]
    w1 = jnp.zeros((din + 1, 2 * gp), jnp.float32)
    w1 = w1.at[:din, :ede].set(jnp.repeat(wg, de, axis=1) * scale)
    w1 = w1.at[din, :gp].set(_NEG_BIG)                      # kill padded gate lanes
    w1 = w1.at[din, :ede].set(jnp.repeat(bg[0], de) * scale)
    w1 = w1.at[:din, gp:gp + ede].set(jnp.transpose(we, (1, 0, 2)).reshape(din, ede))
    w1 = w1.at[din, gp:gp + ede].set(be.reshape(ede))
    # slab 2: adapters (scaled by DE to undo the gate's 1/DE) + adapter biases
    w2 = jnp.zeros((2 * gp, h), jnp.float32)
    w2 = w2.at[:ede, :].set(wa.reshape(ede, h) * float(de))
    w2 = w2.at[gp:gp + ede, :].set(jnp.repeat(ba[:, 0, :], de, axis=0))
    # slab 3: classifier weight + bias row, zero-padded to cp lanes
    w3 = jnp.zeros((h + 1, cp), jnp.float32)
    w3 = w3.at[:h, :c].set(wf)
    w3 = w3.at[h, :c].set(bf[0])

    x2 = x.reshape(n * t, din).astype(matmul_dtype)
    w1 = w1.astype(matmul_dtype)
    w2 = w2.astype(matmul_dtype)
    w3 = w3.astype(matmul_dtype)
    mf = mask.astype(jnp.float32)

    const = lambda i: (0, 0)
    out_pad = pl.pallas_call(
        ensemble_kernel,
        out_shape=jax.ShapeDtypeStruct((n, cp), jnp.float32),
        grid=(n // tb,),
        in_specs=[
            pl.BlockSpec((r, din), lambda i: (i, 0)),        # x rows, batch-tiled
            pl.BlockSpec((tb, t), lambda i: (i, 0)),         # mask, batch-tiled
            pl.BlockSpec((din + 1, 2 * gp), const, pipeline_mode=pl.Buffered(1)),
            pl.BlockSpec((2 * gp, h), const, pipeline_mode=pl.Buffered(1)),
            pl.BlockSpec((h + 1, cp), const, pipeline_mode=pl.Buffered(1)),
        ],
        out_specs=pl.BlockSpec((tb, cp), lambda i: (i, 0)),
        compiler_params=pltpu.CompilerParams(
            dimension_semantics=("parallel",)),
    )(x2, mf, w1, w2, w3)
    return out_pad[:, :c]


def reference_forward(x, mask, params):
    """Pure-JAX mirror of EnsembleV1.forward for verification."""
    wg, bg, we, be, wa, ba, wf, bf = params
    e = we.shape[0]
    h = wa.shape[-1]
    g = jax.nn.softmax((x @ wg + bg[0]) / math.sqrt(float(h)), axis=-1)  # [N,T,E]
    y = jnp.zeros(x.shape[:2] + (h,), jnp.float32)
    for i in range(e):
        out = x @ we[i] + be[i, 0]           # expert.get_logits -> [N, T, DE]
        out = out @ wa[i] + ba[i, 0]         # adapter -> [N, T, H]
        y = y + out * g[:, :, i][..., None]
    m = mask.astype(jnp.float32)
    pooled = (y * m[..., None]).sum(axis=1) / m.sum(axis=1, keepdims=True)
    return pooled @ wf + bf[0]


def init_params(key):
    ks = jax.random.split(key, 8)
    s = 0.05
    wg = jax.random.normal(ks[0], (DIN, E), jnp.float32) * s
    bg = jax.random.normal(ks[1], (1, E), jnp.float32) * s
    we = jax.random.normal(ks[2], (E, DIN, DE), jnp.float32) * s
    be = jax.random.normal(ks[3], (E, 1, DE), jnp.float32) * s
    wa = jax.random.normal(ks[4], (E, DE, H), jnp.float32) * s
    ba = jax.random.normal(ks[5], (E, 1, H), jnp.float32) * s
    wf = jax.random.normal(ks[6], (H, C), jnp.float32) * s
    bf = jax.random.normal(ks[7], (1, C), jnp.float32) * s
    return (wg, bg, we, be, wa, ba, wf, bf)


if __name__ == "__main__":
    key = jax.random.PRNGKey(0)
    kx, kp = jax.random.split(key)
    x = jax.random.normal(kx, (N, T, DIN), jnp.float32)
    # deterministic padded sequence lengths in [1, T] (counts >= 1)
    lengths = 1 + (jnp.arange(N, dtype=jnp.int32) * 3) % T
    mask = (jnp.arange(T)[None, :] < lengths[:, None]).astype(jnp.int32)  # [N, T]
    params = init_params(kp)

    fwd = jax.jit(ensemble_forward)
    out = jax.block_until_ready(fwd(x, mask, params))

    ref = reference_forward(x, mask, params)
    assert out.shape == (N, C)
    # Tolerance covers only the approx EUP reciprocal in the softmax denominator
    # (pooling divide is exact); gate probs sum to 1 up to ~1e-3.
    assert jnp.allclose(out, ref, rtol=1e-3, atol=1e-3), (out, ref)
    print("KERNEL_OK")
</pallas_src>

<mosaic_0001>
module attributes {stable_mosaic.version = 11 : i64} {
  func.func @ensemble_kernel(%arg0: i32, %arg1: memref<128x32xf32, #tpu.memory_space<vmem>>, %arg2: memref<16x8xf32, #tpu.memory_space<vmem>>, %arg3: memref<33x256xf32, #tpu.memory_space<vmem>>, %arg4: memref<256x16xf32, #tpu.memory_space<vmem>>, %arg5: memref<17x128xf32, #tpu.memory_space<vmem>>, %arg6: memref<16x128xf32, #tpu.memory_space<vmem>>) attributes {dimension_semantics = [#tpu.dimension_semantics<parallel>], iteration_bounds = array<i64: 2>, scalar_prefetch = 0 : i64, scratch_operands = 0 : i64, tpu.core_type = #tpu.core_type<tc>, window_params = [{transform_indices = @transform_0, window_bounds = array<i64: 128, 32>}, {transform_indices = @transform_1, window_bounds = array<i64: 16, 8>}, {pipeline_mode = #tpu.pipeline_mode<synchronous>, transform_indices = @transform_2, window_bounds = array<i64: 33, 256>}, {pipeline_mode = #tpu.pipeline_mode<synchronous>, transform_indices = @transform_3, window_bounds = array<i64: 256, 16>}, {pipeline_mode = #tpu.pipeline_mode<synchronous>, transform_indices = @transform_4, window_bounds = array<i64: 17, 128>}, {transform_indices = @transform_5, window_bounds = array<i64: 16, 128>}]} {
    %c0 = arith.constant 0 : index
    %c0_0 = arith.constant 0 : index
    %0 = vector.load %arg1[%c0, %c0_0] : memref<128x32xf32, #tpu.memory_space<vmem>>, vector<128x32xf32>
    %c0_1 = arith.constant 0 : index
    %c0_2 = arith.constant 0 : index
    %1 = vector.load %arg3[%c0_1, %c0_2] : memref<33x256xf32, #tpu.memory_space<vmem>>, vector<32x256xf32>
    %cst = arith.constant dense<0.000000e+00> : vector<128x256xf32>
    %2 = tpu.matmul %0, %1, %cst {dimension_numbers = #tpu.dot_dimension_numbers<[1], [0], [0], [1], [0, 0, 1, 1], [], []>} : vector<128x32xf32>, vector<32x256xf32>, vector<128x256xf32> -> vector<128x256xf32>
    %c32 = arith.constant 32 : index
    %c0_3 = arith.constant 0 : index
    %3 = vector.load %arg3[%c32, %c0_3] : memref<33x256xf32, #tpu.memory_space<vmem>>, vector<1x256xf32>
    %4 = vector.broadcast %3 : vector<1x256xf32> to vector<128x256xf32>
    %5 = arith.addf %2, %4 : vector<128x256xf32>
    %6 = vector.extract_strided_slice %5 {offsets = [0, 0], sizes = [128, 128], strides = [1, 1]} : vector<128x256xf32> to vector<128x128xf32>
    %7 = vector.extract_strided_slice %5 {offsets = [0, 128], sizes = [128, 128], strides = [1, 1]} : vector<128x256xf32> to vector<128x128xf32>
    %cst_4 = arith.constant dense<0xFF800000> : vector<128xf32>
    %8 = vector.multi_reduction <maximumf>, %6, %cst_4 [1] : vector<128x128xf32> to vector<128xf32>
    %9 = vector.shape_cast %8 : vector<128xf32> to vector<128x1xf32>
    %10 = vector.broadcast %9 : vector<128x1xf32> to vector<128x128xf32>
    %11 = arith.subf %6, %10 : vector<128x128xf32>
    %12 = math.exp %11 : vector<128x128xf32>
    %cst_5 = arith.constant dense<0.000000e+00> : vector<128xf32>
    %13 = vector.multi_reduction <add>, %12, %cst_5 [1] : vector<128x128xf32> to vector<128xf32>
    %14 = vector.shape_cast %13 : vector<128xf32> to vector<128x1xf32>
    %15 = tpu.reciprocal %14 {approx = true} : vector<128x1xf32> -> vector<128x1xf32>
    %16 = vector.broadcast %15 : vector<128x1xf32> to vector<128x128xf32>
    %17 = arith.mulf %12, %16 : vector<128x128xf32>
    %18 = arith.mulf %7, %17 : vector<128x128xf32>
    %19 = tpu.concatenate %18, %17 in 1 : vector<128x128xf32>, vector<128x128xf32> -> vector<128x256xf32>
    %c0_6 = arith.constant 0 : index
    %c0_7 = arith.constant 0 : index
    %20 = vector.load %arg4[%c0_6, %c0_7] : memref<256x16xf32, #tpu.memory_space<vmem>>, vector<256x16xf32>
    %cst_8 = arith.constant dense<0.000000e+00> : vector<128x16xf32>
    %21 = tpu.matmul %19, %20, %cst_8 {dimension_numbers = #tpu.dot_dimension_numbers<[1], [0], [0], [1], [0, 0, 1, 1], [], []>} : vector<128x256xf32>, vector<256x16xf32>, vector<128x16xf32> -> vector<128x16xf32>
    %c0_9 = arith.constant 0 : index
    %c0_10 = arith.constant 0 : index
    %22 = vector.load %arg2[%c0_9, %c0_10] : memref<16x8xf32, #tpu.memory_space<vmem>>, vector<16x8xf32>
    %23 = vector.shape_cast %21 : vector<128x16xf32> to vector<16x8x16xf32>
    %24 = vector.shape_cast %22 : vector<16x8xf32> to vector<16x8x1xf32>
    %25 = vector.broadcast %24 : vector<16x8x1xf32> to vector<16x8x16xf32>
    %26 = arith.mulf %23, %25 : vector<16x8x16xf32>
    %cst_11 = arith.constant dense<0.000000e+00> : vector<16x16xf32>
    %27 = vector.multi_reduction <add>, %26, %cst_11 [1] : vector<16x8x16xf32> to vector<16x16xf32>
    %cst_12 = arith.constant dense<0.000000e+00> : vector<16xf32>
    %28 = vector.multi_reduction <add>, %22, %cst_12 [1] : vector<16x8xf32> to vector<16xf32>
    %29 = vector.shape_cast %28 : vector<16xf32> to vector<16x1xf32>
    %30 = vector.broadcast %29 : vector<16x1xf32> to vector<16x16xf32>
    %31 = arith.divf %27, %30 : vector<16x16xf32>
    %c0_13 = arith.constant 0 : index
    %c0_14 = arith.constant 0 : index
    %32 = vector.load %arg5[%c0_13, %c0_14] : memref<17x128xf32, #tpu.memory_space<vmem>>, vector<16x128xf32>
    %cst_15 = arith.constant dense<0.000000e+00> : vector<16x128xf32>
    %33 = tpu.matmul %31, %32, %cst_15 {dimension_numbers = #tpu.dot_dimension_numbers<[1], [0], [0], [1], [0, 0, 1, 1], [], []>} : vector<16x16xf32>, vector<16x128xf32>, vector<16x128xf32> -> vector<16x128xf32>
    %c16 = arith.constant 16 : index
    %c0_16 = arith.constant 0 : index
    %34 = vector.load %arg5[%c16, %c0_16] : memref<17x128xf32, #tpu.memory_space<vmem>>, vector<1x128xf32>
    %35 = vector.broadcast %34 : vector<1x128xf32> to vector<16x128xf32>
    %36 = arith.addf %33, %35 : vector<16x128xf32>
    %c0_17 = arith.constant 0 : index
    %c0_18 = arith.constant 0 : index
    %37 = vector.load %arg6[%c0_17, %c0_18] : memref<16x128xf32, #tpu.memory_space<vmem>>, vector<16x128xf32>
    tpu.vector_store %arg6[%c0_17, %c0_18], %36 {strides = array<i32>} : memref<16x128xf32, #tpu.memory_space<vmem>>, vector<16x128xf32>,
    return
  }
  func.func @transform_0(%arg0: i32) -> (i32, i32) {
    %c0_i32 = arith.constant 0 : i32
    %c0_i32_0 = arith.constant 0 : i32
    return %arg0, %c0_i32 : i32, i32
  }
  func.func @transform_1(%arg0: i32) -> (i32, i32) {
    %c0_i32 = arith.constant 0 : i32
    %c0_i32_0 = arith.constant 0 : i32
    return %arg0, %c0_i32 : i32, i32
  }
  func.func @transform_2(%arg0: i32) -> (i32, i32) {
    %c0_i32 = arith.constant 0 : i32
    %c0_i32_0 = arith.constant 0 : i32
    %c0_i32_1 = arith.constant 0 : i32
    return %c0_i32, %c0_i32_0 : i32, i32
  }
  func.func @transform_3(%arg0: i32) -> (i32, i32) {
    %c0_i32 = arith.constant 0 : i32
    %c0_i32_0 = arith.constant 0 : i32
    %c0_i32_1 = arith.constant 0 : i32
    return %c0_i32, %c0_i32_0 : i32, i32
  }
  func.func @transform_4(%arg0: i32) -> (i32, i32) {
    %c0_i32 = arith.constant 0 : i32
    %c0_i32_0 = arith.constant 0 : i32
    %c0_i32_1 = arith.constant 0 : i32
    return %c0_i32, %c0_i32_0 : i32, i32
  }
  func.func @transform_5(%arg0: i32) -> (i32, i32) {
    %c0_i32 = arith.constant 0 : i32
    %c0_i32_0 = arith.constant 0 : i32
    return %arg0, %c0_i32 : i32, i32
  }
}

</mosaic_0001>

<llo_original>
// kernel: ensemble_forward.1
$region0: #{ensemble_forward.1}
  #allocation0 [shape = 'u32[]', space=smem, size = 0x4, offset = 0x4, fixed_abs, tag = 'smem constant byte address 0x4 - core index']
  #allocation1 [shape = 'u32[144,128]{1,0:T(1,128)}', space=vmem, size = 0x12000, scoped, tag = 'internal scratch']
  %s0 = inlined_call_operand.vmem [shape: f32[256,32], index: 0, kind: input, shape index: {}]
  %s1 = inlined_call_operand.vmem [shape: f32[32,8], index: 1, kind: input, shape index: {}]
  %s2 = inlined_call_operand.vmem [shape: f32[33,256], index: 2, kind: input, shape index: {}]
  %s3 = inlined_call_operand.vmem [shape: f32[256,16], index: 3, kind: input, shape index: {}]
  %s4 = inlined_call_operand.vmem [shape: f32[17,128], index: 4, kind: input, shape index: {}]
  %s5 = inlined_call_operand.vmem [shape: f32[32,128], index: 5, kind: output, shape index: {}]
  %s6 = sld [smem:[#allocation0]]
  $region53: #{ensemble_forward.1} parent=0
    _
  %s8 = ssub.s32 1, %s6
  %s9 = scalar_select 0, %s8, %s6
  loop: start=0, step=1, limit=4
  $region2: #{ensemble_forward.1} parent=0 // loop_pre_header
    _
  $region3: #{ensemble_forward.1} parent=0 // loop_header
    %s11 = sphi 0, %s15
    %p12 = scmp.ge.s32.totalorder %s11, 4
    %s21 = sphi 0, %s23
    %s24 = sphi 0, %s21
    %s25 = sphi 0, %s24
    %s41 = sphi 0, %s25
    %s47 = sphi 0, %s49
    %s50 = sphi 0, %s47
    %s51 = sphi 0, %s50
    %s67 = sphi 0, %s51
    %s71 = sphi 0, %s71
    %s73 = sphi 0, %s71
    %s74 = sphi 0, %s73
    %s88 = sphi 0, %s74
    %s92 = sphi 0, %s92
    %s94 = sphi 0, %s92
    %s95 = sphi 0, %s94
    %s109 = sphi 0, %s95
    %s113 = sphi 0, %s113
    %s115 = sphi 0, %s113
    %s116 = sphi 0, %s115
    %s130 = sphi 0, %s116
    %s136 = sphi 0, %s138
    %s139 = sphi 0, %s136
    %s140 = sphi 0, %s139
    %s156 = sphi 0, %s140
  $region4: #{ensemble_forward.1} parent=0 // loop_header_branch
    %14 = sbr.rel (%p12) target = $region8
  $region5: #{ensemble_forward.1} parent=0 // loop_body
    %s16 = ssub.s32 %s11, 1
    %s17 = ssub.s32 %s11, 2
    %s18 = sadd.s32 %s11, 1
    %s19 = ssub.s32 %s11, %s18
    %p20 = scmp.eq.s32.totalorder %s19, 0
    %s22 = sadd.s32 %s21, 1
    %s23 = scalar_select %p20, %s21, %s22
    %p26 = pneg %p20
    %p27 = scmp.eq.s32.totalorder %s11, 1
    %p28 = por %p26, %p27
    %p29 = scmp.ne.s32.totalorder %s21, %s24
    %p30 = scmp.eq.s32.totalorder %s11, 0
    %p31 = por %p29, %p30
    %p32 = scmp.ne.s32.totalorder %s21, %s24
    %p33 = scmp.eq.s32.totalorder %s16, 1
    %p34 = por %p32, %p33
    %p35 = scmp.ne.s32.totalorder %s24, %s25
    %p36 = scmp.eq.s32.totalorder %s16, 0
    %p37 = por %p35, %p36
    %p38 = scmp.ne.s32.totalorder %s24, %s25
    %p39 = scmp.eq.s32.totalorder %s17, 1
    %p40 = por %p38, %p39
    %p42 = scmp.ne.s32.totalorder %s25, %s41
    %p43 = scmp.eq.s32.totalorder %s17, 0
    %p44 = por %p42, %p43
    %s45 = ssub.s32 %s11, %s18
    %p46 = scmp.eq.s32.totalorder %s45, 0
    %s48 = sadd.s32 %s47, 1
    %s49 = scalar_select %p46, %s47, %s48
    %p52 = pneg %p46
    %p53 = scmp.eq.s32.totalorder %s11, 1
    %p54 = por %p52, %p53
    %p55 = scmp.ne.s32.totalorder %s47, %s50
    %p56 = scmp.eq.s32.totalorder %s11, 0
    %p57 = por %p55, %p56
    %p58 = scmp.ne.s32.totalorder %s47, %s50
    %p59 = scmp.eq.s32.totalorder %s16, 1
    %p60 = por %p58, %p59
    %p61 = scmp.ne.s32.totalorder %s50, %s51
    %p62 = scmp.eq.s32.totalorder %s16, 0
    %p63 = por %p61, %p62
    %p64 = scmp.ne.s32.totalorder %s50, %s51
    %p65 = scmp.eq.s32.totalorder %s17, 1
    %p66 = por %p64, %p65
    %p68 = scmp.ne.s32.totalorder %s51, %s67
    %p69 = scmp.eq.s32.totalorder %s17, 0
    %p70 = por %p68, %p69
    %s72 = sadd.s32 %s71, 1
    %p75 = scmp.eq.s32.totalorder %s11, 1
    %p76 = scmp.ne.s32.totalorder %s71, %s73
    %p77 = scmp.eq.s32.totalorder %s11, 0
    %p78 = por %p76, %p77
    %p79 = scmp.ne.s32.totalorder %s71, %s73
    %p80 = scmp.eq.s32.totalorder %s16, 1
    %p81 = por %p79, %p80
    %p82 = scmp.ne.s32.totalorder %s73, %s74
    %p83 = scmp.eq.s32.totalorder %s16, 0
    %p84 = por %p82, %p83
    %p85 = scmp.ne.s32.totalorder %s73, %s74
    %p86 = scmp.eq.s32.totalorder %s17, 1
    %p87 = por %p85, %p86
    %p89 = scmp.ne.s32.totalorder %s74, %s88
    %p90 = scmp.eq.s32.totalorder %s17, 0
    %p91 = por %p89, %p90
    %s93 = sadd.s32 %s92, 1
    %p96 = scmp.eq.s32.totalorder %s11, 1
    %p97 = scmp.ne.s32.totalorder %s92, %s94
    %p98 = scmp.eq.s32.totalorder %s11, 0
    %p99 = por %p97, %p98
    %p100 = scmp.ne.s32.totalorder %s92, %s94
    %p101 = scmp.eq.s32.totalorder %s16, 1
    %p102 = por %p100, %p101
    %p103 = scmp.ne.s32.totalorder %s94, %s95
    %p104 = scmp.eq.s32.totalorder %s16, 0
    %p105 = por %p103, %p104
    %p106 = scmp.ne.s32.totalorder %s94, %s95
    %p107 = scmp.eq.s32.totalorder %s17, 1
    %p108 = por %p106, %p107
    %p110 = scmp.ne.s32.totalorder %s95, %s109
    %p111 = scmp.eq.s32.totalorder %s17, 0
    %p112 = por %p110, %p111
    %s114 = sadd.s32 %s113, 1
    %p117 = scmp.eq.s32.totalorder %s11, 1
    %p118 = scmp.ne.s32.totalorder %s113, %s115
    %p119 = scmp.eq.s32.totalorder %s11, 0
    %p120 = por %p118, %p119
    %p121 = scmp.ne.s32.totalorder %s113, %s115
    %p122 = scmp.eq.s32.totalorder %s16, 1
    %p123 = por %p121, %p122
    %p124 = scmp.ne.s32.totalorder %s115, %s116
    %p125 = scmp.eq.s32.totalorder %s16, 0
    %p126 = por %p124, %p125
    %p127 = scmp.ne.s32.totalorder %s115, %s116
    %p128 = scmp.eq.s32.totalorder %s17, 1
    %p129 = por %p127, %p128
    %p131 = scmp.ne.s32.totalorder %s116, %s130
    %p132 = scmp.eq.s32.totalorder %s17, 0
    %p133 = por %p131, %p132
    %s134 = ssub.s32 %s11, %s18
    %p135 = scmp.eq.s32.totalorder %s134, 0
    %s137 = sadd.s32 %s136, 1
    %s138 = scalar_select %p135, %s136, %s137
    %p141 = pneg %p135
    %p142 = scmp.eq.s32.totalorder %s11, 1
    %p143 = por %p141, %p142
    %p144 = scmp.ne.s32.totalorder %s136, %s139
    %p145 = scmp.eq.s32.totalorder %s11, 0
    %p146 = por %p144, %p145
    %p147 = scmp.ne.s32.totalorder %s136, %s139
    %p148 = scmp.eq.s32.totalorder %s16, 1
    %p149 = por %p147, %p148
    %p150 = scmp.ne.s32.totalorder %s139, %s140
    %p151 = scmp.eq.s32.totalorder %s16, 0
    %p152 = por %p150, %p151
    %p153 = scmp.ne.s32.totalorder %s139, %s140
    %p154 = scmp.eq.s32.totalorder %s17, 1
    %p155 = por %p153, %p154
    %p157 = scmp.ne.s32.totalorder %s140, %s156
    %p158 = scmp.eq.s32.totalorder %s17, 0
    %p159 = por %p157, %p158
    %p160 = scmp.le.s32.totalorder 1, %s11
    %p161 = scmp.lt.s32.totalorder %s11, 3
    %p162 = pnand %p160, %p161
    %p163 = pneg %p162
    // Predicated region
    $region9: #{ensemble_forward.1} parent=5 // pred_check
      _
    $region10: #{ensemble_forward.1} parent=5 // pred_check_branch
      %165 = sbr.rel (%p162) target = $region12
    $region11: #{ensemble_forward.1} parent=5 // pred_region
      %s166 = ssub.s32 %s11, 1
      // Predicated region
      $region13: #{ensemble_forward.1} parent=11 // pred_check
        %p167 = pneg %p84
      $region14: #{ensemble_forward.1} parent=11 // pred_check_branch
        %169 = sbr.rel (%p167) target = $region16
      $region15: #{ensemble_forward.1} parent=11 // pred_region
        _
      $region16: #{ensemble_forward.1} parent=11 // pred_fallthru
        _
      // Predicated region
      $region17: #{ensemble_forward.1} parent=11 // pred_check
        %p170 = pneg %p105
      $region18: #{ensemble_forward.1} parent=11 // pred_check_branch
        %172 = sbr.rel (%p170) target = $region20
      $region19: #{ensemble_forward.1} parent=11 // pred_region
        _
      $region20: #{ensemble_forward.1} parent=11 // pred_fallthru
        _
      // Predicated region
      $region21: #{ensemble_forward.1} parent=11 // pred_check
        %p173 = pneg %p126
      $region22: #{ensemble_forward.1} parent=11 // pred_check_branch
        %175 = sbr.rel (%p173) target = $region24
      $region23: #{ensemble_forward.1} parent=11 // pred_region
        _
      $region24: #{ensemble_forward.1} parent=11 // pred_fallthru
        _
    $region12: #{ensemble_forward.1} parent=5 // pred_fallthru
      _
    %p176 = scmp.lt.s32.totalorder %s11, 2
    // Predicated region
    $region25: #{ensemble_forward.1} parent=5 // pred_check
      %p177 = pneg %p176
    $region26: #{ensemble_forward.1} parent=5 // pred_check_branch
      %179 = sbr.rel (%p177) target = $region28
    $region27: #{ensemble_forward.1} parent=5 // pred_region
      // Predicated region
      $region29: #{ensemble_forward.1} parent=27 // pred_check
        %p180 = pneg %p31
      $region30: #{ensemble_forward.1} parent=27 // pred_check_branch
        %182 = sbr.rel (%p180) target = $region32
      $region31: #{ensemble_forward.1} parent=27 // pred_region
        %s183 = smul.u32 16, %s11
        %p184 = scmp.lt.s32.totalorder %s183, 31
        %s185 = scalar_select %p184, %s183, 31
        %s186 = smul.addr %s185, 8
        %s187 = scalar_lea.vmem %s0, %s186
        %s188 = smul.u32 16, %s11
      $region32: #{ensemble_forward.1} parent=27 // pred_fallthru
        _
      // Predicated region
      $region33: #{ensemble_forward.1} parent=27 // pred_check
        %p189 = pneg %p57
      $region34: #{ensemble_forward.1} parent=27 // pred_check_branch
        %191 = sbr.rel (%p189) target = $region36
      $region35: #{ensemble_forward.1} parent=27 // pred_region
        %s192 = smul.u32 2, %s11
        %p193 = scmp.lt.s32.totalorder %s192, 3
        %s194 = scalar_select %p193, %s192, 3
        %s195 = smul.addr %s194, 8
        %s196 = scalar_lea.vmem %s1, %s195
        %s197 = smul.u32 2, %s11
      $region36: #{ensemble_forward.1} parent=27 // pred_fallthru
        _
    $region28: #{ensemble_forward.1} parent=5 // pred_fallthru
      _
    %p198 = scmp.le.s32.totalorder 1, %s11
    %p199 = scmp.lt.s32.totalorder %s11, 3
    %p200 = pnand %p198, %p199
    %p201 = pneg %p200
    // Predicated region
    $region37: #{ensemble_forward.1} parent=5 // pred_check
      _
    $region38: #{ensemble_forward.1} parent=5 // pred_check_branch
      %203 = sbr.rel (%p200) target = $region40
    $region39: #{ensemble_forward.1} parent=5 // pred_region
      %s204 = ssub.s32 %s11, 1
      %s205 = smul.u32 16, %s16
      %p206 = scmp.lt.s32.totalorder %s205, 31
      %s207 = scalar_select %p206, %s205, 31
      %s208 = smul.addr %s207, 8
      %s209 = scalar_lea.vmem %s0, %s208
      %p210 = pneg %p37
      %p211 = pneg %p34
      %s212 = smul.u32 2, %s16
      %p213 = scmp.lt.s32.totalorder %s212, 3
      %s214 = scalar_select %p213, %s212, 3
      %s215 = smul.addr %s214, 8
      %s216 = scalar_lea.vmem %s1, %s215
      %p217 = pneg %p63
      %p218 = pneg %p60
      %p219 = pneg %p84
      %p220 = pneg %p81
      %p221 = pneg %p105
      %p222 = pneg %p102
      %p223 = pneg %p126
      %p224 = pneg %p123
      %p225 = pneg %p152
      %p226 = pneg %p149
      %s227 = smul.u32 2, %s16
      %p228 = scmp.lt.s32.totalorder %s227, 3
      %s229 = scalar_select %p228, %s227, 3
      %s230 = smul.addr %s229, 8
      %s231 = scalar_lea.vmem %s5, %s230
      %s232 = smul.u32 16, %s16
      %p233 = scmp.lt.s32.totalorder %s232, 31
      %s234 = scalar_select %p233, %s232, 31
      %s235 = smul.addr %s234, 8
      %s236 = scalar_lea.vmem %s0, %s235
      %s237 = smul.u32 16, %s16
      %s238 = smul.u32 2, %s16
      %p239 = scmp.lt.s32.totalorder %s238, 3
      %s240 = scalar_select %p239, %s238, 3
      %s241 = smul.addr %s240, 8
      %s242 = scalar_lea.vmem %s1, %s241
      %s243 = smul.u32 2, %s16
      %s244 = smul.u32 2, %s16
      %p245 = scmp.lt.s32.totalorder %s244, 3
      %s246 = scalar_select %p245, %s244, 3
      %s247 = smul.addr %s246, 8
      %s248 = scalar_lea.vmem %s5, %s247
      %s249 = smul.u32 2, %s16
      %v250 = vld [vmem:[%s236] sm:$0xff]
      %v251 = vld [vmem:[%s236 + $0x8] sm:$0xff]
      %v252 = vld [vmem:[%s236 + $0x10] sm:$0xff]
      %v253 = vld [vmem:[%s236 + $0x18] sm:$0xff]
      %v254 = vld [vmem:[%s236 + $0x20] sm:$0xff]
      %v255 = vld [vmem:[%s236 + $0x28] sm:$0xff]
      %v256 = vld [vmem:[%s236 + $0x30] sm:$0xff]
      %v257 = vld [vmem:[%s236 + $0x38] sm:$0xff]
      %v258 = vld [vmem:[%s236 + $0x40] sm:$0xff]
      %v259 = vld [vmem:[%s236 + $0x48] sm:$0xff]
      %v260 = vld [vmem:[%s236 + $0x50] sm:$0xff]
      %v261 = vld [vmem:[%s236 + $0x58] sm:$0xff]
      %v262 = vld [vmem:[%s236 + $0x60] sm:$0xff]
      %v263 = vld [vmem:[%s236 + $0x68] sm:$0xff]
      %v264 = vld [vmem:[%s236 + $0x70] sm:$0xff]
      %v265 = vld [vmem:[%s236 + $0x78] sm:$0xff]
      %v266 = vld [vmem:[%s2] sm:$0xff]
      %v267 = vld [vmem:[%s2 + $0x8] sm:$0xff]
      %v268 = vld [vmem:[%s2 + $0x10] sm:$0xff]
      %v269 = vld [vmem:[%s2 + $0x18] sm:$0xff]
      %v270 = vld [vmem:[%s2 + $0x20] sm:$0xff]
      %v271 = vld [vmem:[%s2 + $0x28] sm:$0xff]
      %v272 = vld [vmem:[%s2 + $0x30] sm:$0xff]
      %v273 = vld [vmem:[%s2 + $0x38] sm:$0xff]
      %s274 = scalar_lea.vmem %s2, 64
      %v275 = vld [vmem:[%s274] ss:$8 sm:$0x3]
      %v277 = vlaneseq
      %v278 = vshrl.u32 %v277, 7
      %v279 = vsub.s32 0, %v278
      %v280 = vrot.slane %v275, %v279
      %v281 = vlaneseq
      %v282 = vshrl.u32 %v281, 7
      %v283 = vsub.s32 1, %v282
      %v284 = vrot.slane %v275, %v283
      %vm287 = vcmask 261120
      %v289 = vsel %vm287, %v250, 0
      %v292 = vsel %vm287, %v251, 0
      %v295 = vsel %vm287, %v252, 0
      %v298 = vsel %vm287, %v253, 0
      %v301 = vsel %vm287, %v254, 0
      %v304 = vsel %vm287, %v255, 0
      %v307 = vsel %vm287, %v256, 0
      %v310 = vsel %vm287, %v257, 0
      %v313 = vsel %vm287, %v258, 0
      %v316 = vsel %vm287, %v259, 0
      %v319 = vsel %vm287, %v260, 0
      %v322 = vsel %vm287, %v261, 0
      %v325 = vsel %vm287, %v262, 0
      %v328 = vsel %vm287, %v263, 0
      %v331 = vsel %vm287, %v264, 0
      %v334 = vsel %vm287, %v265, 0
      %336 = vmatprep.subr.mxu0 %v267
      %337 = vmatpush1.msra.mxu0 %v266
      %338 = vmatprep.subr.mxu0 %v269
      %339 = vmatpush1.msra.mxu0 %v268
      %340 = vmatprep.subr.mxu0 %v271
      %341 = vmatpush1.msra.mxu0 %v270
      %342 = vmatprep.subr.mxu0 %v273
      %343 = vmatpush1.msra.mxu0 %v272
      %344 = vmatprep.subr.mxu0 0.0
      %345 = vmatpush1.msra.mxu0 0.0
      %346 = vmatprep.subr.mxu0 0.0
      %347 = vmatpush1.msra.mxu0 0.0
      %348 = vmatprep.subr.mxu0 0.0
      %349 = vmatpush1.msra.mxu0 0.0
      %350 = vmatprep.subr.mxu0 0.0
      %351 = vmatpush1.msra.mxu0 0.0
      %352 = vmatprep.subr.mxu0 0.0
      %353 = vmatpush1.msra.mxu0 0.0
      %354 = vmatprep.subr.mxu0 0.0
      %355 = vmatpush1.msra.mxu0 0.0
      %356 = vmatprep.subr.mxu0 0.0
      %357 = vmatpush1.msra.mxu0 0.0
      %358 = vmatprep.subr.mxu0 0.0
      %359 = vmatpush1.msra.mxu0 0.0
      %360 = vmatprep.subr.mxu0 0.0
      %361 = vmatpush1.msra.mxu0 0.0
      %362 = vmatprep.subr.mxu0 0.0
      %363 = vmatpush1.msra.mxu0 0.0
      %364 = vmatprep.subr.mxu0 0.0
      %365 = vmatpush1.msra.mxu0 0.0
      %366 = vmatprep.subr.mxu0 0.0
      %367 = vmatpush1.msra.mxu0 0.0
      %368 = vmatprep.subr.mxu0 0.0
      %369 = vmatpush1.msra.mxu0 0.0
      %370 = vmatprep.subr.mxu0 0.0
      %371 = vmatpush1.msra.mxu0 0.0
      %372 = vmatprep.subr.mxu0 0.0
      %373 = vmatpush1.msra.mxu0 0.0
      %374 = vmatprep.subr.mxu0 0.0
      %375 = vmatpush1.msra.mxu0 0.0
      %376 = vmatprep.subr.mxu0 0.0
      %377 = vmatpush1.msra.mxu0 0.0
      %378 = vmatprep.subr.mxu0 0.0
      %379 = vmatpush1.msra.mxu0 0.0
      %380 = vmatprep.subr.mxu0 0.0
      %381 = vmatpush1.msra.mxu0 0.0
      %382 = vmatprep.subr.mxu0 0.0
      %383 = vmatpush1.msra.mxu0 0.0
      %384 = vmatprep.subr.mxu0 0.0
      %385 = vmatpush1.msra.mxu0 0.0
      %386 = vmatprep.subr.mxu0 0.0
      %387 = vmatpush1.msra.mxu0 0.0
      %388 = vmatprep.subr.mxu0 0.0
      %389 = vmatpush1.msra.mxu0 0.0
      %390 = vmatprep.subr.mxu0 0.0
      %391 = vmatpush1.msra.mxu0 0.0
      %392 = vmatprep.subr.mxu0 0.0
      %393 = vmatpush1.msra.mxu0 0.0
      %394 = vmatprep.subr.mxu0 0.0
      %395 = vmatpush1.msra.mxu0 0.0
      %396 = vmatprep.subr.mxu0 0.0
      %397 = vmatpush1.msra.mxu0 0.0
      %398 = vmatprep.subr.mxu0 0.0
      %399 = vmatpush1.msra.mxu0 0.0
      %400 = vmatprep.mubr.f32.mxu0 0.0
      %401 = vmatmul.mubr.f32.gmra.mrb[0].mxu0 %v289
      %v402 = vpop.f32.mrb[0].mxu0
      %v403 = vadd.f32 %v280, %v402
      %v404 = vpop.f32.mrb[0].mxu0
      %v405 = vadd.f32 %v284, %v404
      %406 = vmatprep.mubr.f32.mxu0 0.0
      %407 = vmatmul.mubr.f32.gmra.mrb[0].mxu0 %v292
      %v408 = vpop.f32.mrb[0].mxu0
      %v409 = vadd.f32 %v280, %v408
      %v410 = vpop.f32.mrb[0].mxu0
      %v411 = vadd.f32 %v284, %v410
      %412 = vmatprep.mubr.f32.mxu0 0.0
      %413 = vmatmul.mubr.f32.gmra.mrb[0].mxu0 %v295
      %v414 = vpop.f32.mrb[0].mxu0
      %v415 = vadd.f32 %v280, %v414
      %v416 = vpop.f32.mrb[0].mxu0
      %v417 = vadd.f32 %v284, %v416
      %418 = vmatprep.mubr.f32.mxu0 0.0
      %419 = vmatmul.mubr.f32.gmra.mrb[0].mxu0 %v298
      %v420 = vpop.f32.mrb[0].mxu0
      %v421 = vadd.f32 %v280, %v420
      %v422 = vpop.f32.mrb[0].mxu0
      %v423 = vadd.f32 %v284, %v422
      %424 = vmatprep.mubr.f32.mxu0 0.0
      %425 = vmatmul.mubr.f32.gmra.mrb[0].mxu0 %v301
      %v426 = vpop.f32.mrb[0].mxu0
      %v427 = vadd.f32 %v280, %v426
      %v428 = vpop.f32.mrb[0].mxu0
      %v429 = vadd.f32 %v284, %v428
      %430 = vmatprep.mubr.f32.mxu0 0.0
      %431 = vmatmul.mubr.f32.gmra.mrb[0].mxu0 %v304
      %v432 = vpop.f32.mrb[0].mxu0
      %v433 = vadd.f32 %v280, %v432
      %v434 = vpop.f32.mrb[0].mxu0
      %v435 = vadd.f32 %v284, %v434
      %436 = vmatprep.mubr.f32.mxu0 0.0
      %437 = vmatmul.mubr.f32.gmra.mrb[0].mxu0 %v307
      %v438 = vpop.f32.mrb[0].mxu0
      %v439 = vadd.f32 %v280, %v438
      %v440 = vpop.f32.mrb[0].mxu0
      %v441 = vadd.f32 %v284, %v440
      %442 = vmatprep.mubr.f32.mxu0 0.0
      %443 = vmatmul.mubr.f32.gmra.mrb[0].mxu0 %v310
      %v444 = vpop.f32.mrb[0].mxu0
      %v445 = vadd.f32 %v280, %v444
      %v446 = vpop.f32.mrb[0].mxu0
      %v447 = vadd.f32 %v284, %v446
      %448 = vmatprep.mubr.f32.mxu0 0.0
      %449 = vmatmul.mubr.f32.gmra.mrb[0].mxu0 %v313
      %v450 = vpop.f32.mrb[0].mxu0
      %v451 = vadd.f32 %v280, %v450
      %v452 = vpop.f32.mrb[0].mxu0
      %v453 = vadd.f32 %v284, %v452
      %454 = vmatprep.mubr.f32.mxu0 0.0
      %455 = vmatmul.mubr.f32.gmra.mrb[0].mxu0 %v316
      %v456 = vpop.f32.mrb[0].mxu0
      %v457 = vadd.f32 %v280, %v456
      %v458 = vpop.f32.mrb[0].mxu0
      %v459 = vadd.f32 %v284, %v458
      %460 = vmatprep.mubr.f32.mxu0 0.0
      %461 = vmatmul.mubr.f32.gmra.mrb[0].mxu0 %v319
      %v462 = vpop.f32.mrb[0].mxu0
      %v463 = vadd.f32 %v280, %v462
      %v464 = vpop.f32.mrb[0].mxu0
      %v465 = vadd.f32 %v284, %v464
      %466 = vmatprep.mubr.f32.mxu0 0.0
      %467 = vmatmul.mubr.f32.gmra.mrb[0].mxu0 %v322
      %v468 = vpop.f32.mrb[0].mxu0
      %v469 = vadd.f32 %v280, %v468
      %v470 = vpop.f32.mrb[0].mxu0
      %v471 = vadd.f32 %v284, %v470
      %472 = vmatprep.mubr.f32.mxu0 0.0
      %473 = vmatmul.mubr.f32.gmra.mrb[0].mxu0 %v325
      %v474 = vpop.f32.mrb[0].mxu0
      %v475 = vadd.f32 %v280, %v474
      %v476 = vpop.f32.mrb[0].mxu0
      %v477 = vadd.f32 %v284, %v476
      %478 = vmatprep.mubr.f32.mxu0 0.0
      %479 = vmatmul.mubr.f32.gmra.mrb[0].mxu0 %v328
      %v480 = vpop.f32.mrb[0].mxu0
      %v481 = vadd.f32 %v280, %v480
      %v482 = vpop.f32.mrb[0].mxu0
      %v483 = vadd.f32 %v284, %v482
      %484 = vmatprep.mubr.f32.mxu0 0.0
      %485 = vmatmul.mubr.f32.gmra.mrb[0].mxu0 %v331
      %v486 = vpop.f32.mrb[0].mxu0
      %v487 = vadd.f32 %v280, %v486
      %v488 = vpop.f32.mrb[0].mxu0
      %v489 = vadd.f32 %v284, %v488
      %490 = vmatprep.mubr.f32.mxu0 0.0
      %491 = vmatmul.mubr.f32.gmra.mrb[0].mxu0 %v334
      %v492 = vpop.f32.mrb[0].mxu0
      %v493 = vadd.f32 %v280, %v492
      %v494 = vpop.f32.mrb[0].mxu0
      %v495 = vadd.f32 %v284, %v494
      %496 = vdwg.mxu0
      %497 = vmax.xlane.f32.xlu0 %v403
      %v498 = vpop.xlane.xlu0 %497
      %499 = vmax.xlane.f32.xlu0 %v409
      %v500 = vpop.xlane.xlu0 %499
      %501 = vmax.xlane.f32.xlu0 %v415
      %v502 = vpop.xlane.xlu0 %501
      %503 = vmax.xlane.f32.xlu0 %v421
      %v504 = vpop.xlane.xlu0 %503
      %505 = vmax.xlane.f32.xlu0 %v427
      %v506 = vpop.xlane.xlu0 %505
      %507 = vmax.xlane.f32.xlu0 %v433
      %v508 = vpop.xlane.xlu0 %507
      %509 = vmax.xlane.f32.xlu0 %v439
      %v510 = vpop.xlane.xlu0 %509
      %511 = vmax.xlane.f32.xlu0 %v445
      %v512 = vpop.xlane.xlu0 %511
      %513 = vmax.xlane.f32.xlu0 %v451
      %v514 = vpop.xlane.xlu0 %513
      %515 = vmax.xlane.f32.xlu0 %v457
      %v516 = vpop.xlane.xlu0 %515
      %517 = vmax.xlane.f32.xlu0 %v463
      %v518 = vpop.xlane.xlu0 %517
      %519 = vmax.xlane.f32.xlu0 %v469
      %v520 = vpop.xlane.xlu0 %519
      %521 = vmax.xlane.f32.xlu0 %v475
      %v522 = vpop.xlane.xlu0 %521
      %523 = vmax.xlane.f32.xlu0 %v481
      %v524 = vpop.xlane.xlu0 %523
      %525 = vmax.xlane.f32.xlu0 %v487
      %v526 = vpop.xlane.xlu0 %525
      %527 = vmax.xlane.f32.xlu0 %v493
      %v528 = vpop.xlane.xlu0 %527
      %v529 = vsub.f32 %v403, %v498
      %v530 = vsub.f32 %v409, %v500
      %v531 = vsub.f32 %v415, %v502
      %v532 = vsub.f32 %v421, %v504
      %v533 = vsub.f32 %v427, %v506
      %v534 = vsub.f32 %v433, %v508
      %v535 = vsub.f32 %v439, %v510
      %v536 = vsub.f32 %v445, %v512
      %v537 = vsub.f32 %v451, %v514
      %v538 = vsub.f32 %v457, %v516
      %v539 = vsub.f32 %v463, %v518
      %v540 = vsub.f32 %v469, %v520
      %v541 = vsub.f32 %v475, %v522
      %v542 = vsub.f32 %v481, %v524
      %v543 = vsub.f32 %v487, %v526
      %v544 = vsub.f32 %v493, %v528
      %v545 = vmul.f32 %v529, 1.442695
      %v546 = vpow.pop %v545
      %v547 = vmul.f32 %v530, 1.442695
      %v548 = vpow.pop %v547
      %v549 = vmul.f32 %v531, 1.442695
      %v550 = vpow.pop %v549
      %v551 = vmul.f32 %v532, 1.442695
      %v552 = vpow.pop %v551
      %v553 = vmul.f32 %v533, 1.442695
      %v554 = vpow.pop %v553
      %v555 = vmul.f32 %v534, 1.442695
      %v556 = vpow.pop %v555
      %v557 = vmul.f32 %v535, 1.442695
      %v558 = vpow.pop %v557
      %v559 = vmul.f32 %v536, 1.442695
      %v560 = vpow.pop %v559
      %v561 = vmul.f32 %v537, 1.442695
      %v562 = vpow.pop %v561
      %v563 = vmul.f32 %v538, 1.442695
      %v564 = vpow.pop %v563
      %v565 = vmul.f32 %v539, 1.442695
      %v566 = vpow.pop %v565
      %v567 = vmul.f32 %v540, 1.442695
      %v568 = vpow.pop %v567
      %v569 = vmul.f32 %v541, 1.442695
      %v570 = vpow.pop %v569
      %v571 = vmul.f32 %v542, 1.442695
      %v572 = vpow.pop %v571
      %v573 = vmul.f32 %v543, 1.442695
      %v574 = vpow.pop %v573
      %v575 = vmul.f32 %v544, 1.442695
      %v576 = vpow.pop %v575
      %577 = vadd.xlane.f32.xlu0 %v546
      %v578 = vpop.xlane.xlu0 %577
      %579 = vadd.xlane.f32.xlu0 %v548
      %v580 = vpop.xlane.xlu0 %579
      %581 = vadd.xlane.f32.xlu0 %v550
      %v582 = vpop.xlane.xlu0 %581
      %583 = vadd.xlane.f32.xlu0 %v552
      %v584 = vpop.xlane.xlu0 %583
      %585 = vadd.xlane.f32.xlu0 %v554
      %v586 = vpop.xlane.xlu0 %585
      %587 = vadd.xlane.f32.xlu0 %v556
      %v588 = vpop.xlane.xlu0 %587
      %589 = vadd.xlane.f32.xlu0 %v558
      %v590 = vpop.xlane.xlu0 %589
      %591 = vadd.xlane.f32.xlu0 %v560
      %v592 = vpop.xlane.xlu0 %591
      %593 = vadd.xlane.f32.xlu0 %v562
      %v594 = vpop.xlane.xlu0 %593
      %595 = vadd.xlane.f32.xlu0 %v564
      %v596 = vpop.xlane.xlu0 %595
      %597 = vadd.xlane.f32.xlu0 %v566
      %v598 = vpop.xlane.xlu0 %597
      %599 = vadd.xlane.f32.xlu0 %v568
      %v600 = vpop.xlane.xlu0 %599
      %601 = vadd.xlane.f32.xlu0 %v570
      %v602 = vpop.xlane.xlu0 %601
      %603 = vadd.xlane.f32.xlu0 %v572
      %v604 = vpop.xlane.xlu0 %603
      %605 = vadd.xlane.f32.xlu0 %v574
      %v606 = vpop.xlane.xlu0 %605
      %607 = vadd.xlane.f32.xlu0 %v576
      %v608 = vpop.xlane.xlu0 %607
      %v609 = vrcp.pop %v578
      %v610 = vrcp.pop %v580
      %v611 = vrcp.pop %v582
      %v612 = vrcp.pop %v584
      %v613 = vrcp.pop %v586
      %v614 = vrcp.pop %v588
      %v615 = vrcp.pop %v590
      %v616 = vrcp.pop %v592
      %v617 = vrcp.pop %v594
      %v618 = vrcp.pop %v596
      %v619 = vrcp.pop %v598
      %v620 = vrcp.pop %v600
      %v621 = vrcp.pop %v602
      %v622 = vrcp.pop %v604
      %v623 = vrcp.pop %v606
      %v624 = vrcp.pop %v608
      %v625 = vmul.f32 %v546, %v609
      %v626 = vmul.f32 %v548, %v610
      %v627 = vmul.f32 %v550, %v611
      %v628 = vmul.f32 %v552, %v612
      %v629 = vmul.f32 %v554, %v613
      %v630 = vmul.f32 %v556, %v614
      %v631 = vmul.f32 %v558, %v615
      %v632 = vmul.f32 %v560, %v616
      %v633 = vmul.f32 %v562, %v617
      %v634 = vmul.f32 %v564, %v618
      %v635 = vmul.f32 %v566, %v619
      %v636 = vmul.f32 %v568, %v620
      %v637 = vmul.f32 %v570, %v621
      %v638 = vmul.f32 %v572, %v622
      %v639 = vmul.f32 %v574, %v623
      %v640 = vmul.f32 %v576, %v624
      %v641 = vmul.f32 %v405, %v625
      %v642 = vmul.f32 %v411, %v626
      %v643 = vmul.f32 %v417, %v627
      %v644 = vmul.f32 %v423, %v628
      %v645 = vmul.f32 %v429, %v629
      %v646 = vmul.f32 %v435, %v630
      %v647 = vmul.f32 %v441, %v631
      %v648 = vmul.f32 %v447, %v632
      %v649 = vmul.f32 %v453, %v633
      %v650 = vmul.f32 %v459, %v634
      %v651 = vmul.f32 %v465, %v635
      %v652 = vmul.f32 %v471, %v636
      %v653 = vmul.f32 %v477, %v637
      %v654 = vmul.f32 %v483, %v638
      %v655 = vmul.f32 %v489, %v639
      %v656 = vmul.f32 %v495, %v640
      %v657 = vld [vmem:[%s3] sm:$0xff]
      %v658 = vld [vmem:[%s3 + $0x8] sm:$0xff]
      %v659 = vld [vmem:[%s3 + $0x10] sm:$0xff]
      %v660 = vld [vmem:[%s3 + $0x18] sm:$0xff]
      %v661 = vld [vmem:[%s3 + $0x20] sm:$0xff]
      %v662 = vld [vmem:[%s3 + $0x28] sm:$0xff]
      %v663 = vld [vmem:[%s3 + $0x30] sm:$0xff]
      %v664 = vld [vmem:[%s3 + $0x38] sm:$0xff]
      %v665 = vld [vmem:[%s3 + $0x40] sm:$0xff]
      %v666 = vld [vmem:[%s3 + $0x48] sm:$0xff]
      %v667 = vld [vmem:[%s3 + $0x50] sm:$0xff]
      %v668 = vld [vmem:[%s3 + $0x58] sm:$0xff]
      %v669 = vld [vmem:[%s3 + $0x60] sm:$0xff]
      %v670 = vld [vmem:[%s3 + $0x68] sm:$0xff]
      %v671 = vld [vmem:[%s3 + $0x70] sm:$0xff]
      %v672 = vld [vmem:[%s3 + $0x78] sm:$0xff]
      %v673 = vld [vmem:[%s3 + $0x80] sm:$0xff]
      %v674 = vld [vmem:[%s3 + $0x88] sm:$0xff]
      %v675 = vld [vmem:[%s3 + $0x90] sm:$0xff]
      %v676 = vld [vmem:[%s3 + $0x98] sm:$0xff]
      %v677 = vld [vmem:[%s3 + $0xa0] sm:$0xff]
      %v678 = vld [vmem:[%s3 + $0xa8] sm:$0xff]
      %v679 = vld [vmem:[%s3 + $0xb0] sm:$0xff]
      %v680 = vld [vmem:[%s3 + $0xb8] sm:$0xff]
      %v681 = vld [vmem:[%s3 + $0xc0] sm:$0xff]
      %v682 = vld [vmem:[%s3 + $0xc8] sm:$0xff]
      %v683 = vld [vmem:[%s3 + $0xd0] sm:$0xff]
      %v684 = vld [vmem:[%s3 + $0xd8] sm:$0xff]
      %v685 = vld [vmem:[%s3 + $0xe0] sm:$0xff]
      %v686 = vld [vmem:[%s3 + $0xe8] sm:$0xff]
      %v687 = vld [vmem:[%s3 + $0xf0] sm:$0xff]
      %v688 = vld [vmem:[%s3 + $0xf8] sm:$0xff]
      %689 = vmatprep.subr.mxu0 0.0
      %690 = vmatpush1.msra.mxu0 %v657
      %691 = vmatprep.subr.mxu0 0.0
      %692 = vmatpush1.msra.mxu0 %v658
      %693 = vmatprep.subr.mxu0 0.0
      %694 = vmatpush1.msra.mxu0 %v659
      %695 = vmatprep.subr.mxu0 0.0
      %696 = vmatpush1.msra.mxu0 %v660
      %697 = vmatprep.subr.mxu0 0.0
      %698 = vmatpush1.msra.mxu0 %v661
      %699 = vmatprep.subr.mxu0 0.0
      %700 = vmatpush1.msra.mxu0 %v662
      %701 = vmatprep.subr.mxu0 0.0
      %702 = vmatpush1.msra.mxu0 %v663
      %703 = vmatprep.subr.mxu0 0.0
      %704 = vmatpush1.msra.mxu0 %v664
      %705 = vmatprep.subr.mxu0 0.0
      %706 = vmatpush1.msra.mxu0 %v665
      %707 = vmatprep.subr.mxu0 0.0
      %708 = vmatpush1.msra.mxu0 %v666
      %709 = vmatprep.subr.mxu0 0.0
      %710 = vmatpush1.msra.mxu0 %v667
      %711 = vmatprep.subr.mxu0 0.0
      %712 = vmatpush1.msra.mxu0 %v668
      %713 = vmatprep.subr.mxu0 0.0
      %714 = vmatpush1.msra.mxu0 %v669
      %715 = vmatprep.subr.mxu0 0.0
      %716 = vmatpush1.msra.mxu0 %v670
      %717 = vmatprep.subr.mxu0 0.0
      %718 = vmatpush1.msra.mxu0 %v671
      %719 = vmatprep.subr.mxu0 0.0
      %720 = vmatpush1.msra.mxu0 %v672
      %721 = vmatprep.subr.mxu0 0.0
      %722 = vmatpush1.msra.mxu0 %v673
      %723 = vmatprep.subr.mxu0 0.0
      %724 = vmatpush1.msra.mxu0 %v674
      %725 = vmatprep.subr.mxu0 0.0
      %726 = vmatpush1.msra.mxu0 %v675
      %727 = vmatprep.subr.mxu0 0.0
      %728 = vmatpush1.msra.mxu0 %v676
      %729 = vmatprep.subr.mxu0 0.0
      %730 = vmatpush1.msra.mxu0 %v677
      %731 = vmatprep.subr.mxu0 0.0
      %732 = vmatpush1.msra.mxu0 %v678
      %733 = vmatprep.subr.mxu0 0.0
      %734 = vmatpush1.msra.mxu0 %v679
      %735 = vmatprep.subr.mxu0 0.0
      %736 = vmatpush1.msra.mxu0 %v680
      %737 = vmatprep.subr.mxu0 0.0
      %738 = vmatpush1.msra.mxu0 %v681
      %739 = vmatprep.subr.mxu0 0.0
      %740 = vmatpush1.msra.mxu0 %v682
      %741 = vmatprep.subr.mxu0 0.0
      %742 = vmatpush1.msra.mxu0 %v683
      %743 = vmatprep.subr.mxu0 0.0
      %744 = vmatpush1.msra.mxu0 %v684
      %745 = vmatprep.subr.mxu0 0.0
      %746 = vmatpush1.msra.mxu0 %v685
      %747 = vmatprep.subr.mxu0 0.0
      %748 = vmatpush1.msra.mxu0 %v686
      %749 = vmatprep.subr.mxu0 0.0
      %750 = vmatpush1.msra.mxu0 %v687
      %751 = vmatprep.subr.mxu0 0.0
      %752 = vmatpush1.msra.mxu0 %v688
      %753 = vmatprep.mubr.f32.mxu0 %v625
      %754 = vmatmul.mubr.f32.gmra.mrb[0].mxu0 %v641
      %v755 = vpop.f32.mrb[0].mxu0
      %v756 = vadd.f32 0.0, %v755
      %v757 = vpop.f32.mrb[0].mxu0
      %758 = vmatprep.mubr.f32.mxu0 %v626
      %759 = vmatmul.mubr.f32.gmra.mrb[0].mxu0 %v642
      %v760 = vpop.f32.mrb[0].mxu0
      %v761 = vadd.f32 0.0, %v760
      %v762 = vpop.f32.mrb[0].mxu0
      %763 = vmatprep.mubr.f32.mxu0 %v627
      %764 = vmatmul.mubr.f32.gmra.mrb[0].mxu0 %v643
      %v765 = vpop.f32.mrb[0].mxu0
      %v766 = vadd.f32 0.0, %v765
      %v767 = vpop.f32.mrb[0].mxu0
      %768 = vmatprep.mubr.f32.mxu0 %v628
      %769 = vmatmul.mubr.f32.gmra.mrb[0].mxu0 %v644
      %v770 = vpop.f32.mrb[0].mxu0
      %v771 = vadd.f32 0.0, %v770
      %v772 = vpop.f32.mrb[0].mxu0
      %773 = vmatprep.mubr.f32.mxu0 %v629
      %774 = vmatmul.mubr.f32.gmra.mrb[0].mxu0 %v645
      %v775 = vpop.f32.mrb[0].mxu0
      %v776 = vadd.f32 0.0, %v775
      %v777 = vpop.f32.mrb[0].mxu0
      %778 = vmatprep.mubr.f32.mxu0 %v630
      %779 = vmatmul.mubr.f32.gmra.mrb[0].mxu0 %v646
      %v780 = vpop.f32.mrb[0].mxu0
      %v781 = vadd.f32 0.0, %v780
      %v782 = vpop.f32.mrb[0].mxu0
      %783 = vmatprep.mubr.f32.mxu0 %v631
      %784 = vmatmul.mubr.f32.gmra.mrb[0].mxu0 %v647
      %v785 = vpop.f32.mrb[0].mxu0
      %v786 = vadd.f32 0.0, %v785
      %v787 = vpop.f32.mrb[0].mxu0
      %788 = vmatprep.mubr.f32.mxu0 %v632
      %789 = vmatmul.mubr.f32.gmra.mrb[0].mxu0 %v648
      %v790 = vpop.f32.mrb[0].mxu0
      %v791 = vadd.f32 0.0, %v790
      %v792 = vpop.f32.mrb[0].mxu0
      %793 = vmatprep.mubr.f32.mxu0 %v633
      %794 = vmatmul.mubr.f32.gmra.mrb[0].mxu0 %v649
      %v795 = vpop.f32.mrb[0].mxu0
      %v796 = vadd.f32 0.0, %v795
      %v797 = vpop.f32.mrb[0].mxu0
      %798 = vmatprep.mubr.f32.mxu0 %v634
      %799 = vmatmul.mubr.f32.gmra.mrb[0].mxu0 %v650
      %v800 = vpop.f32.mrb[0].mxu0
      %v801 = vadd.f32 0.0, %v800
      %v802 = vpop.f32.mrb[0].mxu0
      %803 = vmatprep.mubr.f32.mxu0 %v635
      %804 = vmatmul.mubr.f32.gmra.mrb[0].mxu0 %v651
      %v805 = vpop.f32.mrb[0].mxu0
      %v806 = vadd.f32 0.0, %v805
      %v807 = vpop.f32.mrb[0].mxu0
      %808 = vmatprep.mubr.f32.mxu0 %v636
      %809 = vmatmul.mubr.f32.gmra.mrb[0].mxu0 %v652
      %v810 = vpop.f32.mrb[0].mxu0
      %v811 = vadd.f32 0.0, %v810
      %v812 = vpop.f32.mrb[0].mxu0
      %813 = vmatprep.mubr.f32.mxu0 %v637
      %814 = vmatmul.mubr.f32.gmra.mrb[0].mxu0 %v653
      %v815 = vpop.f32.mrb[0].mxu0
      %v816 = vadd.f32 0.0, %v815
      %v817 = vpop.f32.mrb[0].mxu0
      %818 = vmatprep.mubr.f32.mxu0 %v638
      %819 = vmatmul.mubr.f32.gmra.mrb[0].mxu0 %v654
      %v820 = vpop.f32.mrb[0].mxu0
      %v821 = vadd.f32 0.0, %v820
      %v822 = vpop.f32.mrb[0].mxu0
      %823 = vmatprep.mubr.f32.mxu0 %v639
      %824 = vmatmul.mubr.f32.gmra.mrb[0].mxu0 %v655
      %v825 = vpop.f32.mrb[0].mxu0
      %v826 = vadd.f32 0.0, %v825
      %v827 = vpop.f32.mrb[0].mxu0
      %828 = vmatprep.mubr.f32.mxu0 %v640
      %829 = vmatmul.mubr.f32.gmra.mrb[0].mxu0 %v656
      %v830 = vpop.f32.mrb[0].mxu0
      %v831 = vadd.f32 0.0, %v830
      %v832 = vpop.f32.mrb[0].mxu0
      %833 = vdwg.mxu0
      %v834 = vld [vmem:[%s242] sm:$0xff]
      %v835 = vld [vmem:[%s242 + $0x8] sm:$0xff]
      %v836 = vlaneseq
      %v837 = vshrl.u32 %v836, 7
      %v838 = vsub.s32 0, %v837
      %v839 = vrot.slane %v834, %v838
      %841 = vbcast.lane.b32.xlu0 %v839, 256
      %v842 = vpop.permute.xlu0 %841
      %v843 = vlaneseq
      %v844 = vshrl.u32 %v843, 7
      %v845 = vsub.s32 1, %v844
      %v846 = vrot.slane %v834, %v845
      %848 = vbcast.lane.b32.xlu0 %v846, 256
      %v849 = vpop.permute.xlu0 %848
      %v850 = vlaneseq
      %v851 = vshrl.u32 %v850, 7
      %v852 = vsub.s32 2, %v851
      %v853 = vrot.slane %v834, %v852
      %855 = vbcast.lane.b32.xlu0 %v853, 256
      %v856 = vpop.permute.xlu0 %855
      %v857 = vlaneseq
      %v858 = vshrl.u32 %v857, 7
      %v859 = vsub.s32 3, %v858
      %v860 = vrot.slane %v834, %v859
      %862 = vbcast.lane.b32.xlu0 %v860, 256
      %v863 = vpop.permute.xlu0 %862
      %v864 = vlaneseq
      %v865 = vshrl.u32 %v864, 7
      %v866 = vsub.s32 4, %v865
      %v867 = vrot.slane %v834, %v866
      %869 = vbcast.lane.b32.xlu0 %v867, 256
      %v870 = vpop.permute.xlu0 %869
      %v871 = vlaneseq
      %v872 = vshrl.u32 %v871, 7
      %v873 = vsub.s32 5, %v872
      %v874 = vrot.slane %v834, %v873
      %876 = vbcast.lane.b32.xlu0 %v874, 256
      %v877 = vpop.permute.xlu0 %876
      %v878 = vlaneseq
      %v879 = vshrl.u32 %v878, 7
      %v880 = vsub.s32 6, %v879
      %v881 = vrot.slane %v834, %v880
      %883 = vbcast.lane.b32.xlu0 %v881, 256
      %v884 = vpop.permute.xlu0 %883
      %v885 = vlaneseq
      %v886 = vshrl.u32 %v885, 7
      %v887 = vsub.s32 7, %v886
      %v888 = vrot.slane %v834, %v887
      %890 = vbcast.lane.b32.xlu0 %v888, 256
      %v891 = vpop.permute.xlu0 %890
      %v892 = vlaneseq
      %v893 = vshrl.u32 %v892, 7
      %v894 = vsub.s32 0, %v893
      %v895 = vrot.slane %v835, %v894
      %897 = vbcast.lane.b32.xlu0 %v895, 256
      %v898 = vpop.permute.xlu0 %897
      %v899 = vlaneseq
      %v900 = vshrl.u32 %v899, 7
      %v901 = vsub.s32 1, %v900
      %v902 = vrot.slane %v835, %v901
      %904 = vbcast.lane.b32.xlu0 %v902, 256
      %v905 = vpop.permute.xlu0 %904
      %v906 = vlaneseq
      %v907 = vshrl.u32 %v906, 7
      %v908 = vsub.s32 2, %v907
      %v909 = vrot.slane %v835, %v908
      %911 = vbcast.lane.b32.xlu0 %v909, 256
      %v912 = vpop.permute.xlu0 %911
      %v913 = vlaneseq
      %v914 = vshrl.u32 %v913, 7
      %v915 = vsub.s32 3, %v914
      %v916 = vrot.slane %v835, %v915
      %918 = vbcast.lane.b32.xlu0 %v916, 256
      %v919 = vpop.permute.xlu0 %918
      %v920 = vlaneseq
      %v921 = vshrl.u32 %v920, 7
      %v922 = vsub.s32 4, %v921
      %v923 = vrot.slane %v835, %v922
      %925 = vbcast.lane.b32.xlu0 %v923, 256
      %v926 = vpop.permute.xlu0 %925
      %v927 = vlaneseq
      %v928 = vshrl.u32 %v927, 7
      %v929 = vsub.s32 5, %v928
      %v930 = vrot.slane %v835, %v929
      %932 = vbcast.lane.b32.xlu0 %v930, 256
      %v933 = vpop.permute.xlu0 %932
      %v934 = vlaneseq
      %v935 = vshrl.u32 %v934, 7
      %v936 = vsub.s32 6, %v935
      %v937 = vrot.slane %v835, %v936
      %939 = vbcast.lane.b32.xlu0 %v937, 256
      %v940 = vpop.permute.xlu0 %939
      %v941 = vlaneseq
      %v942 = vshrl.u32 %v941, 7
      %v943 = vsub.s32 7, %v942
      %v944 = vrot.slane %v835, %v943
      %946 = vbcast.lane.b32.xlu0 %v944, 256
      %v947 = vpop.permute.xlu0 %946
      %v948 = vmul.f32 %v756, %v842
      %v949 = vmul.f32 %v761, %v849
      %v950 = vmul.f32 %v766, %v856
      %v951 = vmul.f32 %v771, %v863
      %v952 = vmul.f32 %v776, %v870
      %v953 = vmul.f32 %v781, %v877
      %v954 = vmul.f32 %v786, %v884
      %v955 = vmul.f32 %v791, %v891
      %v956 = vmul.f32 %v796, %v898
      %v957 = vmul.f32 %v801, %v905
      %v958 = vmul.f32 %v806, %v912
      %v959 = vmul.f32 %v811, %v919
      %v960 = vmul.f32 %v816, %v926
      %v961 = vmul.f32 %v821, %v933
      %v962 = vmul.f32 %v826, %v940
      %v963 = vmul.f32 %v831, %v947
      %vm964 = vcmask 130048
      %v965 = vsel %vm964, %v948, 0.0
      %v966 = vrot.slane %v965, 4
      %v967 = vadd.f32 %v965, %v966
      %v968 = vrot.slane %v967, 2
      %v969 = vadd.f32 %v967, %v968
      %v970 = vrot.slane %v969, 1
      %v971 = vadd.f32 %v969, %v970
      %v972 = vsel %vm964, %v949, 0.0
      %v973 = vrot.slane %v972, 4
      %v974 = vadd.f32 %v972, %v973
      %v975 = vrot.slane %v974, 2
      %v976 = vadd.f32 %v974, %v975
      %v977 = vrot.slane %v976, 1
      %v978 = vadd.f32 %v976, %v977
      %v979 = vsel %vm964, %v950, 0.0
      %v980 = vrot.slane %v979, 4
      %v981 = vadd.f32 %v979, %v980
      %v982 = vrot.slane %v981, 2
      %v983 = vadd.f32 %v981, %v982
      %v984 = vrot.slane %v983, 1
      %v985 = vadd.f32 %v983, %v984
      %v986 = vsel %vm964, %v951, 0.0
      %v987 = vrot.slane %v986, 4
      %v988 = vadd.f32 %v986, %v987
      %v989 = vrot.slane %v988, 2
      %v990 = vadd.f32 %v988, %v989
      %v991 = vrot.slane %v990, 1
      %v992 = vadd.f32 %v990, %v991
      %v993 = vsel %vm964, %v952, 0.0
      %v994 = vrot.slane %v993, 4
      %v995 = vadd.f32 %v993, %v994
      %v996 = vrot.slane %v995, 2
      %v997 = vadd.f32 %v995, %v996
      %v998 = vrot.slane %v997, 1
      %v999 = vadd.f32 %v997, %v998
      %v1000 = vsel %vm964, %v953, 0.0
      %v1001 = vrot.slane %v1000, 4
      %v1002 = vadd.f32 %v1000, %v1001
      %v1003 = vrot.slane %v1002, 2
      %v1004 = vadd.f32 %v1002, %v1003
      %v1005 = vrot.slane %v1004, 1
      %v1006 = vadd.f32 %v1004, %v1005
      %v1007 = vsel %vm964, %v954, 0.0
      %v1008 = vrot.slane %v1007, 4
      %v1009 = vadd.f32 %v1007, %v1008
      %v1010 = vrot.slane %v1009, 2
      %v1011 = vadd.f32 %v1009, %v1010
      %v1012 = vrot.slane %v1011, 1
      %v1013 = vadd.f32 %v1011, %v1012
      %v1014 = vsel %vm964, %v955, 0.0
      %v1015 = vrot.slane %v1014, 4
      %v1016 = vadd.f32 %v1014, %v1015
      %v1017 = vrot.slane %v1016, 2
      %v1018 = vadd.f32 %v1016, %v1017
      %v1019 = vrot.slane %v1018, 1
      %v1020 = vadd.f32 %v1018, %v1019
      %v1021 = vsel %vm964, %v956, 0.0
      %v1022 = vrot.slane %v1021, 4
      %v1023 = vadd.f32 %v1021, %v1022
      %v1024 = vrot.slane %v1023, 2
      %v1025 = vadd.f32 %v1023, %v1024
      %v1026 = vrot.slane %v1025, 1
      %v1027 = vadd.f32 %v1025, %v1026
      %v1028 = vsel %vm964, %v957, 0.0
      %v1029 = vrot.slane %v1028, 4
      %v1030 = vadd.f32 %v1028, %v1029
      %v1031 = vrot.slane %v1030, 2
      %v1032 = vadd.f32 %v1030, %v1031
      %v1033 = vrot.slane %v1032, 1
      %v1034 = vadd.f32 %v1032, %v1033
      %v1035 = vsel %vm964, %v958, 0.0
      %v1036 = vrot.slane %v1035, 4
      %v1037 = vadd.f32 %v1035, %v1036
      %v1038 = vrot.slane %v1037, 2
      %v1039 = vadd.f32 %v1037, %v1038
      %v1040 = vrot.slane %v1039, 1
      %v1041 = vadd.f32 %v1039, %v1040
      %v1042 = vsel %vm964, %v959, 0.0
      %v1043 = vrot.slane %v1042, 4
      %v1044 = vadd.f32 %v1042, %v1043
      %v1045 = vrot.slane %v1044, 2
      %v1046 = vadd.f32 %v1044, %v1045
      %v1047 = vrot.slane %v1046, 1
      %v1048 = vadd.f32 %v1046, %v1047
      %v1049 = vsel %vm964, %v960, 0.0
      %v1050 = vrot.slane %v1049, 4
      %v1051 = vadd.f32 %v1049, %v1050
      %v1052 = vrot.slane %v1051, 2
      %v1053 = vadd.f32 %v1051, %v1052
      %v1054 = vrot.slane %v1053, 1
      %v1055 = vadd.f32 %v1053, %v1054
      %v1056 = vsel %vm964, %v961, 0.0
      %v1057 = vrot.slane %v1056, 4
      %v1058 = vadd.f32 %v1056, %v1057
      %v1059 = vrot.slane %v1058, 2
      %v1060 = vadd.f32 %v1058, %v1059
      %v1061 = vrot.slane %v1060, 1
      %v1062 = vadd.f32 %v1060, %v1061
      %v1063 = vsel %vm964, %v962, 0.0
      %v1064 = vrot.slane %v1063, 4
      %v1065 = vadd.f32 %v1063, %v1064
      %v1066 = vrot.slane %v1065, 2
      %v1067 = vadd.f32 %v1065, %v1066
      %v1068 = vrot.slane %v1067, 1
      %v1069 = vadd.f32 %v1067, %v1068
      %v1070 = vsel %vm964, %v963, 0.0
      %v1071 = vrot.slane %v1070, 4
      %v1072 = vadd.f32 %v1070, %v1071
      %v1073 = vrot.slane %v1072, 2
      %v1074 = vadd.f32 %v1072, %v1073
      %v1075 = vrot.slane %v1074, 1
      %v1076 = vadd.f32 %v1074, %v1075
      %vm1077 = vcmask 64512
      %v1078 = vsel %vm1077, %v834, 0.0
      %1079 = vadd.xlane.f32.xlu0 %v1078
      %v1080 = vpop.xlane.xlu0 %1079
      %v1081 = vsel %vm1077, %v835, 0.0
      %1082 = vadd.xlane.f32.xlu0 %v1081
      %v1083 = vpop.xlane.xlu0 %1082
      %v1086 = vrot.slane %v1080, 1
      %v1087 = vrot.slane %v1080, 2
      %v1088 = vrot.slane %v1080, 3
      %v1089 = vrot.slane %v1080, 4
      %v1090 = vrot.slane %v1080, 5
      %v1091 = vrot.slane %v1080, 6
      %v1092 = vrot.slane %v1080, 7
      %v1093 = vrot.slane %v1083, 1
      %v1094 = vrot.slane %v1083, 2
      %v1095 = vrot.slane %v1083, 3
      %v1096 = vrot.slane %v1083, 4
      %v1097 = vrot.slane %v1083, 5
      %v1098 = vrot.slane %v1083, 6
      %v1099 = vrot.slane %v1083, 7
      %v1116 = vrcp.pop %v1080
      %v1117 = vmul.f32 %v971, %v1116
      %v1118 = vrcp.pop %v1086
      %v1119 = vmul.f32 %v978, %v1118
      %v1120 = vrcp.pop %v1087
      %v1121 = vmul.f32 %v985, %v1120
      %v1122 = vrcp.pop %v1088
      %v1123 = vmul.f32 %v992, %v1122
      %v1124 = vrcp.pop %v1089
      %v1125 = vmul.f32 %v999, %v1124
      %v1126 = vrcp.pop %v1090
      %v1127 = vmul.f32 %v1006, %v1126
      %v1128 = vrcp.pop %v1091
      %v1129 = vmul.f32 %v1013, %v1128
      %v1130 = vrcp.pop %v1092
      %v1131 = vmul.f32 %v1020, %v1130
      %v1132 = vrcp.pop %v1083
      %v1133 = vmul.f32 %v1027, %v1132
      %v1134 = vrcp.pop %v1093
      %v1135 = vmul.f32 %v1034, %v1134
      %v1136 = vrcp.pop %v1094
      %v1137 = vmul.f32 %v1041, %v1136
      %v1138 = vrcp.pop %v1095
      %v1139 = vmul.f32 %v1048, %v1138
      %v1140 = vrcp.pop %v1096
      %v1141 = vmul.f32 %v1055, %v1140
      %v1142 = vrcp.pop %v1097
      %v1143 = vmul.f32 %v1062, %v1142
      %v1144 = vrcp.pop %v1098
      %v1145 = vmul.f32 %v1069, %v1144
      %v1146 = vrcp.pop %v1099
      %v1147 = vmul.f32 %v1076, %v1146
      %v1148 = vld [vmem:[%s4] sm:$0xff]
      %v1149 = vld [vmem:[%s4 + $0x8] sm:$0xff]
      %v1150 = vld [vmem:[%s4 + $0x10] sm:$0x1]
      %v1151 = vlaneseq
      %v1152 = vshrl.u32 %v1151, 7
      %v1153 = vsub.s32 0, %v1152
      %v1154 = vrot.slane %v1150, %v1153
      %v1171 = vrot.slane %v1119, 7
      %vm1172 = vcmask 1041409
      %v1173 = vsel %vm1172, %v1171, %v1117
      %v1174 = vrot.slane %v1121, 6
      %vm1175 = vcmask 1042434
      %v1176 = vsel %vm1175, %v1174, %v1173
      %v1177 = vrot.slane %v1123, 5
      %vm1178 = vcmask 1043459
      %v1179 = vsel %vm1178, %v1177, %v1176
      %v1180 = vrot.slane %v1125, 4
      %vm1181 = vcmask 1044484
      %v1182 = vsel %vm1181, %v1180, %v1179
      %v1183 = vrot.slane %v1127, 3
      %vm1184 = vcmask 1045509
      %v1185 = vsel %vm1184, %v1183, %v1182
      %v1186 = vrot.slane %v1129, 2
      %vm1187 = vcmask 1046534
      %v1188 = vsel %vm1187, %v1186, %v1185
      %v1189 = vrot.slane %v1131, 1
      %vm1190 = vcmask 1047559
      %v1191 = vsel %vm1190, %v1189, %v1188
      %v1192 = vrot.slane %v1135, 7
      %v1193 = vsel %vm1172, %v1192, %v1133
      %v1194 = vrot.slane %v1137, 6
      %v1195 = vsel %vm1175, %v1194, %v1193
      %v1196 = vrot.slane %v1139, 5
      %v1197 = vsel %vm1178, %v1196, %v1195
      %v1198 = vrot.slane %v1141, 4
      %v1199 = vsel %vm1181, %v1198, %v1197
      %v1200 = vrot.slane %v1143, 3
      %v1201 = vsel %vm1184, %v1200, %v1199
      %v1202 = vrot.slane %v1145, 2
      %v1203 = vsel %vm1187, %v1202, %v1201
      %v1204 = vrot.slane %v1147, 1
      %v1205 = vsel %vm1190, %v1204, %v1203
      %v1206 = vsel %vm964, %v1191, 0
      %v1208 = vsel %vm964, %v1205, 0
      %1210 = vmatprep.subr.mxu0 0.0
      %1211 = vmatpush1.msra.mxu0 %v1148
      %1212 = vmatprep.subr.mxu0 0.0
      %1213 = vmatpush1.msra.mxu0 %v1149
      %1214 = vmatprep.subr.mxu0 0.0
      %1215 = vmatpush1.msra.mxu0 0.0
      %1216 = vmatprep.subr.mxu0 0.0
      %1217 = vmatpush1.msra.mxu0 0.0
      %1218 = vmatprep.subr.mxu0 0.0
      %1219 = vmatpush1.msra.mxu0 0.0
      %1220 = vmatprep.subr.mxu0 0.0
      %1221 = vmatpush1.msra.mxu0 0.0
      %1222 = vmatprep.subr.mxu0 0.0
      %1223 = vmatpush1.msra.mxu0 0.0
      %1224 = vmatprep.subr.mxu0 0.0
      %1225 = vmatpush1.msra.mxu0 0.0
      %1226 = vmatprep.subr.mxu0 0.0
      %1227 = vmatpush1.msra.mxu0 0.0
      %1228 = vmatprep.subr.mxu0 0.0
      %1229 = vmatpush1.msra.mxu0 0.0
      %1230 = vmatprep.subr.mxu0 0.0
      %1231 = vmatpush1.msra.mxu0 0.0
      %1232 = vmatprep.subr.mxu0 0.0
      %1233 = vmatpush1.msra.mxu0 0.0
      %1234 = vmatprep.subr.mxu0 0.0
      %1235 = vmatpush1.msra.mxu0 0.0
      %1236 = vmatprep.subr.mxu0 0.0
      %1237 = vmatpush1.msra.mxu0 0.0
      %1238 = vmatprep.subr.mxu0 0.0
      %1239 = vmatpush1.msra.mxu0 0.0
      %1240 = vmatprep.subr.mxu0 0.0
      %1241 = vmatpush1.msra.mxu0 0.0
      %1242 = vmatprep.subr.mxu0 0.0
      %1243 = vmatpush1.msra.mxu0 0.0
      %1244 = vmatprep.subr.mxu0 0.0
      %1245 = vmatpush1.msra.mxu0 0.0
      %1246 = vmatprep.subr.mxu0 0.0
      %1247 = vmatpush1.msra.mxu0 0.0
      %1248 = vmatprep.subr.mxu0 0.0
      %1249 = vmatpush1.msra.mxu0 0.0
      %1250 = vmatprep.subr.mxu0 0.0
      %1251 = vmatpush1.msra.mxu0 0.0
      %1252 = vmatprep.subr.mxu0 0.0
      %1253 = vmatpush1.msra.mxu0 0.0
      %1254 = vmatprep.subr.mxu0 0.0
      %1255 = vmatpush1.msra.mxu0 0.0
      %1256 = vmatprep.subr.mxu0 0.0
      %1257 = vmatpush1.msra.mxu0 0.0
      %1258 = vmatprep.subr.mxu0 0.0
      %1259 = vmatpush1.msra.mxu0 0.0
      %1260 = vmatprep.subr.mxu0 0.0
      %1261 = vmatpush1.msra.mxu0 0.0
      %1262 = vmatprep.subr.mxu0 0.0
      %1263 = vmatpush1.msra.mxu0 0.0
      %1264 = vmatprep.subr.mxu0 0.0
      %1265 = vmatpush1.msra.mxu0 0.0
      %1266 = vmatprep.subr.mxu0 0.0
      %1267 = vmatpush1.msra.mxu0 0.0
      %1268 = vmatprep.subr.mxu0 0.0
      %1269 = vmatpush1.msra.mxu0 0.0
      %1270 = vmatprep.subr.mxu0 0.0
      %1271 = vmatpush1.msra.mxu0 0.0
      %1272 = vmatprep.subr.mxu0 0.0
      %1273 = vmatpush1.msra.mxu0 0.0
      %1274 = vmatprep.mubr.f32.mxu0 0.0
      %1275 = vmatmul.mubr.f32.gmra.mrb[0].mxu0 %v1206
      %v1276 = vpop.f32.mrb[0].mxu0
      %v1277 = vadd.f32 %v1154, %v1276
      %v1278 = vpop.f32.mrb[0].mxu0
      %1279 = vmatprep.mubr.f32.mxu0 0.0
      %1280 = vmatmul.mubr.f32.gmra.mrb[0].mxu0 %v1208
      %v1281 = vpop.f32.mrb[0].mxu0
      %v1282 = vadd.f32 %v1154, %v1281
      %v1283 = vpop.f32.mrb[0].mxu0
      %1284 = vdwg.mxu0
      %1285 = vst [vmem:[%s248] sm:$0xff] %v1277
      %1286 = vst [vmem:[%s248 + $0x8] sm:$0xff] %v1282
      %s1287 = smul.u32 2, %s16
      %p1288 = scmp.lt.s32.totalorder %s1287, 3
      %s1289 = scalar_select %p1288, %s1287, 3
      %s1290 = smul.addr %s1289, 8
      %s1291 = scalar_lea.vmem %s5, %s1290
      // Predicated region
      $region41: #{ensemble_forward.1} parent=39 // pred_check
        %p1292 = pneg %p149
      $region42: #{ensemble_forward.1} parent=39 // pred_check_branch
        %1294 = sbr.rel (%p1292) target = $region44
      $region43: #{ensemble_forward.1} parent=39 // pred_region
        %s1295 = smul.u32 2, %s16
      $region44: #{ensemble_forward.1} parent=39 // pred_fallthru
        _
    $region40: #{ensemble_forward.1} parent=5 // pred_fallthru
      _
    %p1296 = scmp.le.s32.totalorder 2, %s11
    // Predicated region
    $region45: #{ensemble_forward.1} parent=5 // pred_check
      %p1297 = pneg %p1296
    $region46: #{ensemble_forward.1} parent=5 // pred_check_branch
      %1299 = sbr.rel (%p1297) target = $region48
    $region47: #{ensemble_forward.1} parent=5 // pred_region
      %s1300 = ssub.s32 %s11, 2
      // Predicated region
      $region49: #{ensemble_forward.1} parent=47 // pred_check
        %p1301 = pneg %p155
      $region50: #{ensemble_forward.1} parent=47 // pred_check_branch
        %1303 = sbr.rel (%p1301) target = $region52
      $region51: #{ensemble_forward.1} parent=47 // pred_region
        %s1304 = smul.u32 2, %s17
        %p1305 = scmp.lt.s32.totalorder %s1304, 3
        %s1306 = scalar_select %p1305, %s1304, 3
        %s1307 = smul.addr %s1306, 8
        %s1308 = scalar_lea.vmem %s5, %s1307
      $region52: #{ensemble_forward.1} parent=47 // pred_fallthru
        _
    $region48: #{ensemble_forward.1} parent=5 // pred_fallthru
      _
  $region6: #{ensemble_forward.1} parent=0 // loop_footer
    %s15 = sadd.s32 1, %s11
  $region7: #{ensemble_forward.1} parent=0 // loop_footer_branch
    %10 = sbr.rel target = $region3
  $region8: #{ensemble_forward.1} parent=0 // loop_exit
    _

</llo_original>
